<compile_context>
chip_gen: v7x
topology: tpu7x:2x2x1
jax: 0.10.0
libtpu: 0.0.40
codegen_flags: <defaults>
</compile_context>

<pallas_src>
import functools

import jax
import jax.numpy as jnp
from jax.experimental import pallas as pl
from jax.experimental.pallas import tpu as pltpu


def _ce_label_smooth_kernel(x_ref, tgt_ref, rowloss_ref, *, num_classes, epsilon):
    """Per-row smoothed CE.

    x_ref:       (TB, C) logits in their native dtype (f32 / bf16)
    tgt_ref:     (TB, 1) int32 class indices
    rowloss_ref: (TB, 1) f32 per-row loss
    """
    tb, c = x_ref.shape

    # Row max on the native dtype; max commutes with the monotone f32 cast, so
    # no f32 copy of the tile is ever materialized in VMEM.
    m = jnp.max(x_ref[...], axis=-1, keepdims=True).astype(jnp.float32)      # (TB, 1)

    # Chain 1: load -> cast -> sub -> exp -> row-sum (fuses per-vreg).
    lse = jnp.log(jnp.sum(jnp.exp(x_ref[...].astype(jnp.float32) - m),
                          axis=-1, keepdims=True))                           # (TB, 1)

    # Chain 2: single fused weighted row reduction replacing the separate
    # x_target and sum(x) reductions:
    #   sum_c x*w = (eps/C) * sum(x) + (1-eps) * x[target]
    class_ids = jax.lax.broadcasted_iota(jnp.int32, (1, c), 1)               # (1, C)
    off = jnp.float32(epsilon / num_classes)
    on = jnp.float32(1.0 - epsilon + epsilon / num_classes)
    w = jnp.where(class_ids == tgt_ref[...], on, off)                        # (TB, C)
    wsum = jnp.sum(x_ref[...].astype(jnp.float32) * w,
                   axis=-1, keepdims=True)                                   # (TB, 1)

    # loss_r = (m + lse) - sum_c x[r,c] * w[r,c]
    # (Out-of-range targets silently get w = eps/C everywhere, unlike PyTorch
    #  which would error — inputs are assumed trusted.)
    rowloss_ref[...] = (m + lse) - wsum


def _choose_block_rows(b, c, itemsize):
    """Pick a batch-tile height.

    Targets ~4 MiB of logits per tile (with no in-kernel f32 copy, two such
    tiles double-buffered fit under every generation's scoped-VMEM default:
    v5e 16 MiB, v6e/v7x 32 MiB), but never collapses to a single grid step
    when the batch allows >= 4 steps: >= 2 steps per TensorCore keeps the v7x
    megacore busy and keeps BlockSpec double-buffering alive on every chip.
    """
    if b <= 16:
        return b                                     # full-array block (tiny problem)
    tb_mem = (4 * 1024 * 1024) // max(1, c * itemsize)
    tb_mem = max(16, (tb_mem // 16) * 16)            # sublane-safe for f32 (8) and bf16 (16)
    tb_steps = ((pl.cdiv(b, 4) + 15) // 16) * 16     # aim for >= 4 grid steps
    tb = min(tb_mem, tb_steps)
    return max(16, min(tb, b))


def cross_entropy_label_smooth(inputs, targets, num_classes, epsilon=0.1,
                               block_rows=None):
    """inputs: (B, C) float logits (any float dtype); targets: (B,) int labels -> scalar loss."""
    b, c = inputs.shape
    assert c == num_classes
    targets_2d = targets.astype(jnp.int32).reshape(b, 1)

    itemsize = jnp.dtype(inputs.dtype).itemsize
    if block_rows is None:
        block_rows = _choose_block_rows(b, c, itemsize)

    grid = (pl.cdiv(b, block_rows),)
    kernel = functools.partial(
        _ce_label_smooth_kernel, num_classes=num_classes, epsilon=float(epsilon))

    per_row = pl.pallas_call(
        kernel,
        out_shape=jax.ShapeDtypeStruct((b, 1), jnp.float32),
        grid=grid,
        in_specs=[
            pl.BlockSpec((block_rows, c), lambda i: (i, 0)),   # native-dtype logits
            pl.BlockSpec((block_rows, 1), lambda i: (i, 0)),   # int32 targets
        ],
        out_specs=pl.BlockSpec((block_rows, 1), lambda i: (i, 0)),
        compiler_params=pltpu.CompilerParams(
            dimension_semantics=("parallel",)),                # 2-TC sharding on v7x
        cost_estimate=pl.CostEstimate(
            flops=5 * b * c,
            transcendentals=b * c,
            bytes_accessed=b * c * itemsize + 2 * b * 4,
        ),
    )(inputs, targets_2d)

    # (-q * log_probs).mean(0).sum() == sum of per-row losses / B
    return jnp.sum(per_row) / jnp.float32(b)


def _reference(inputs, targets, num_classes, epsilon=0.1):
    log_probs = jax.nn.log_softmax(inputs.astype(jnp.float32), axis=1)
    one_hot = jax.nn.one_hot(targets, num_classes, dtype=jnp.float32)
    q = (1.0 - epsilon) * one_hot + epsilon / num_classes
    return (-q * log_probs).mean(0).sum()


if __name__ == "__main__":
    key = jax.random.PRNGKey(0)
    k1, k2, k3, k4, k5, k6 = jax.random.split(key, 6)

    # Case 1: small f32 problem — single full-array block, grid=(1,).
    b1, c1 = 8, 32
    logits1 = jax.random.normal(k1, (b1, c1), dtype=jnp.float32)
    labels1 = jax.random.randint(k2, (b1,), 0, c1, dtype=jnp.int32)
    loss1 = jax.block_until_ready(
        cross_entropy_label_smooth(logits1, labels1, c1, epsilon=0.1))
    ref1 = _reference(logits1, labels1, c1, epsilon=0.1)
    assert jnp.allclose(loss1, ref1, atol=1e-5, rtol=1e-5), (loss1, ref1)

    # Case 2: bf16 logits kept in native dtype; auto tiling gives 4 parallel
    # 16-row blocks (>= 2 grid steps per v7x TensorCore, pipelining enabled).
    b2, c2 = 64, 256
    logits2 = jax.random.normal(k3, (b2, c2), dtype=jnp.float32).astype(jnp.bfloat16)
    labels2 = jax.random.randint(k4, (b2,), 0, c2, dtype=jnp.int32)
    loss2 = jax.block_until_ready(
        cross_entropy_label_smooth(logits2, labels2, c2, epsilon=0.1))
    ref2 = _reference(logits2, labels2, c2, epsilon=0.1)
    assert jnp.allclose(loss2, ref2, atol=1e-4, rtol=1e-4), (loss2, ref2)

    # Case 3: batch not a multiple of the block size (40 rows, 16-row tiles):
    # exercises the padded last tile, whose garbage rows are masked on writeback.
    b3, c3 = 40, 128
    logits3 = jax.random.normal(k5, (b3, c3), dtype=jnp.float32)
    labels3 = jax.random.randint(k6, (b3,), 0, c3, dtype=jnp.int32)
    loss3 = jax.block_until_ready(
        cross_entropy_label_smooth(logits3, labels3, c3, epsilon=0.1))
    ref3 = _reference(logits3, labels3, c3, epsilon=0.1)
    assert jnp.allclose(loss3, ref3, atol=1e-5, rtol=1e-5), (loss3, ref3)

    print("KERNEL_OK")
</pallas_src>

<mosaic_0001>
module attributes {stable_mosaic.version = 11 : i64} {
  func.func @_ce_label_smooth_kernel(%arg0: i32, %arg1: memref<8x32xf32, #tpu.memory_space<vmem>>, %arg2: memref<8x1xi32, #tpu.memory_space<vmem>>, %arg3: memref<8x1xf32, #tpu.memory_space<vmem>>) attributes {dimension_semantics = [#tpu.dimension_semantics<parallel>], iteration_bounds = array<i64: 1>, scalar_prefetch = 0 : i64, scratch_operands = 0 : i64, tpu.core_type = #tpu.core_type<tc>, window_params = [{transform_indices = @transform_0, window_bounds = array<i64: 8, 32>}, {transform_indices = @transform_1, window_bounds = array<i64: 8, 1>}, {transform_indices = @transform_2, window_bounds = array<i64: 8, 1>}]} {
    %c0 = arith.constant 0 : index
    %c0_0 = arith.constant 0 : index
    %0 = vector.load %arg1[%c0, %c0_0] : memref<8x32xf32, #tpu.memory_space<vmem>>, vector<8x32xf32>
    %cst = arith.constant dense<0xFF800000> : vector<8xf32>
    %1 = vector.multi_reduction <maximumf>, %0, %cst [1] : vector<8x32xf32> to vector<8xf32>
    %2 = vector.shape_cast %1 : vector<8xf32> to vector<8x1xf32>
    %c0_1 = arith.constant 0 : index
    %c0_2 = arith.constant 0 : index
    %3 = vector.load %arg1[%c0_1, %c0_2] : memref<8x32xf32, #tpu.memory_space<vmem>>, vector<8x32xf32>
    %4 = vector.broadcast %2 : vector<8x1xf32> to vector<8x32xf32>
    %5 = arith.subf %3, %4 : vector<8x32xf32>
    %6 = math.exp %5 : vector<8x32xf32>
    %cst_3 = arith.constant dense<0.000000e+00> : vector<8xf32>
    %7 = vector.multi_reduction <add>, %6, %cst_3 [1] : vector<8x32xf32> to vector<8xf32>
    %8 = vector.shape_cast %7 : vector<8xf32> to vector<8x1xf32>
    %9 = math.log %8 : vector<8x1xf32>
    %10 = tpu.iota {dimensions = array<i32: 1>} : vector<1x32xi32>
    %c0_4 = arith.constant 0 : index
    %c0_5 = arith.constant 0 : index
    %11 = vector.load %arg2[%c0_4, %c0_5] : memref<8x1xi32, #tpu.memory_space<vmem>>, vector<8x1xi32>
    %12 = vector.broadcast %10 : vector<1x32xi32> to vector<8x32xi32>
    %13 = vector.broadcast %11 : vector<8x1xi32> to vector<8x32xi32>
    %14 = arith.cmpi eq, %12, %13 : vector<8x32xi32>
    %cst_6 = arith.constant 0.903124988 : f32
    %cst_7 = arith.constant 3.125000e-03 : f32
    %15 = vector.broadcast %cst_6 : f32 to vector<8x32xf32>
    %16 = vector.broadcast %cst_7 : f32 to vector<8x32xf32>
    %17 = arith.select %14, %15, %16 : vector<8x32xi1>, vector<8x32xf32>
    %c0_8 = arith.constant 0 : index
    %c0_9 = arith.constant 0 : index
    %18 = vector.load %arg1[%c0_8, %c0_9] : memref<8x32xf32, #tpu.memory_space<vmem>>, vector<8x32xf32>
    %19 = arith.mulf %18, %17 : vector<8x32xf32>
    %cst_10 = arith.constant dense<0.000000e+00> : vector<8xf32>
    %20 = vector.multi_reduction <add>, %19, %cst_10 [1] : vector<8x32xf32> to vector<8xf32>
    %21 = vector.shape_cast %20 : vector<8xf32> to vector<8x1xf32>
    %22 = arith.addf %2, %9 : vector<8x1xf32>
    %23 = arith.subf %22, %21 : vector<8x1xf32>
    %c0_11 = arith.constant 0 : index
    %c0_12 = arith.constant 0 : index
    %24 = vector.load %arg3[%c0_11, %c0_12] : memref<8x1xf32, #tpu.memory_space<vmem>>, vector<8x1xf32>
    tpu.vector_store %arg3[%c0_11, %c0_12], %23 {strides = array<i32>} : memref<8x1xf32, #tpu.memory_space<vmem>>, vector<8x1xf32>,
    return
  }
  func.func @transform_0(%arg0: i32) -> (i32, i32) {
    %c0_i32 = arith.constant 0 : i32
    %c0_i32_0 = arith.constant 0 : i32
    return %arg0, %c0_i32 : i32, i32
  }
  func.func @transform_1(%arg0: i32) -> (i32, i32) {
    %c0_i32 = arith.constant 0 : i32
    %c0_i32_0 = arith.constant 0 : i32
    return %arg0, %c0_i32 : i32, i32
  }
  func.func @transform_2(%arg0: i32) -> (i32, i32) {
    %c0_i32 = arith.constant 0 : i32
    %c0_i32_0 = arith.constant 0 : i32
    return %arg0, %c0_i32 : i32, i32
  }
}

</mosaic_0001>

<llo_original>
// kernel: tpu_custom_call.1
$region0: #{tpu_custom_call.1}
  #allocation0 [shape = 'u32[]', space=smem, size = 0x4, offset = 0x4, fixed_abs, tag = 'smem constant byte address 0x4 - core index']
  #allocation1 [shape = 'u32[144,128]{1,0:T(1,128)}', space=vmem, size = 0x12000, scoped, tag = 'internal scratch']
  %s0 = inlined_call_operand.vmem [shape: f32[8,32], index: 0, kind: input, shape index: {}]
  %s1 = inlined_call_operand.vmem [shape: s32[8,1], index: 1, kind: input, shape index: {}]
  %s2 = inlined_call_operand.vmem [shape: f32[8,1], index: 2, kind: output, shape index: {}]
  %s3 = sld [smem:[#allocation0]]
  $region18: #{tpu_custom_call.1} parent=0
    _
  %s5 = ssub.s32 1, %s3
  %s6 = scalar_select 0, %s5, %s3
  // Predicated region
  $region2: #{tpu_custom_call.1} parent=0 // pred_check
    _
  $region3: #{tpu_custom_call.1} parent=0 // pred_check_branch
    %8 = sbr.rel (0) target = $region5
  $region4: #{tpu_custom_call.1} parent=0 // pred_region
    _
  $region5: #{tpu_custom_call.1} parent=0 // pred_fallthru
    _
  // Predicated region
  $region6: #{tpu_custom_call.1} parent=0 // pred_check
    _
  $region7: #{tpu_custom_call.1} parent=0 // pred_check_branch
    %10 = sbr.rel (0) target = $region9
  $region8: #{tpu_custom_call.1} parent=0 // pred_region
    _
  $region9: #{tpu_custom_call.1} parent=0 // pred_fallthru
    _
  %v11 = vld [vmem:[%s0] sm:$0xff]
  %vm12 = vcmask 261120
  %v13 = vsel %vm12, %v11, -inf
  %14 = vmax.xlane.f32.xlu0 %v13
  %v15 = vpop.xlane.xlu0 %14
  %v16 = vsub.f32 %v11, %v15
  %v17 = vmul.f32 %v16, 1.442695
  %v18 = vpow.pop %v17
  %v19 = vsel %vm12, %v18, 0.0
  %20 = vadd.xlane.f32.xlu0 %v19
  %v21 = vpop.xlane.xlu0 %20
  %v22 = vlog2.pop %v21
  %v23 = vmul.f32 %v22, 0.6931472
  %v24 = vlaneseq
  %v25 = vand.u32 %v24, 127
  %v26 = vld [vmem:[%s1] sm:$0xff]
  %27 = vset.pattern.permute.xlu0 0
  %28 = vperm.xlu0 %27, %v26
  %v29 = vpop.permute.xlu0 %28
  %vm30 = vcmp.eq.s32.totalorder %v25, %v29
  %v31 = vsel %vm30, 0.903125, 0.003125
  %v32 = vmul.f32 %v11, %v31
  %v33 = vsel %vm12, %v32, 0.0
  %34 = vadd.xlane.f32.xlu0 %v33
  %v35 = vpop.xlane.xlu0 %34
  %v36 = vadd.f32 %v15, %v23
  %v37 = vsub.f32 %v36, %v35
  %vm38 = vcmask 7168
  %39 = vst.msk [vmem:[%s2] sm:$0xff] %vm38, %v37
  // Predicated region
  $region10: #{tpu_custom_call.1} parent=0 // pred_check
    _
  $region11: #{tpu_custom_call.1} parent=0 // pred_check_branch
    %41 = sbr.rel (0) target = $region13
  $region12: #{tpu_custom_call.1} parent=0 // pred_region
    _
  $region13: #{tpu_custom_call.1} parent=0 // pred_fallthru
    _
  // Predicated region
  $region14: #{tpu_custom_call.1} parent=0 // pred_check
    _
  $region15: #{tpu_custom_call.1} parent=0 // pred_check_branch
    %43 = sbr.rel (0) target = $region17
  $region16: #{tpu_custom_call.1} parent=0 // pred_region
    _
  $region17: #{tpu_custom_call.1} parent=0 // pred_fallthru
    _

</llo_original>
